<compile_context>
chip_gen: v6e
topology: v6e:2x2x1
jax: 0.10.0
libtpu: 0.0.40
codegen_flags: <defaults>
</compile_context>

<pallas_src>
import functools

import jax
import jax.numpy as jnp
import numpy as np
from jax.experimental import pallas as pl
from jax.experimental.pallas import tpu as pltpu


def _mlm_ce_kernel(
    logits_ref,     # (tm, V)  native-dtype tile of MLM logits
    tgt_ref,        # (tm, 1)  int32 tile of MLM targets (-1 == ignore)
    sum_out_ref,    # (1, 1, 128) f32 per-core partial loss sum
    cnt_out_ref,    # (1, 1, 128) f32 per-core valid-token count
    sum_acc,        # (tm, 1)  f32 scratch accumulator (per-row loss sums)
    cnt_acc,        # (tm, 1)  f32 scratch accumulator (per-row valid counts)
    *,
    n_rows,         # static: true number of rows N (masks the padded tail tile)
):
    c = pl.program_id(0)           # "parallel" core-split axis
    i = pl.program_id(1)           # "arbitrary" row-tile axis (reduction)
    spc = pl.num_programs(1)       # tiles per core

    @pl.when(i == 0)
    def _():
        sum_acc[...] = jnp.zeros_like(sum_acc)
        cnt_acc[...] = jnp.zeros_like(cnt_acc)

    # Upcast in-kernel; HBM traffic stays at the native (e.g. bf16) width.
    x = logits_ref[...].astype(jnp.float32)          # (tm, V)
    tm, v = x.shape
    labels = tgt_ref[...]                            # (tm, 1) int32

    # Global row ids for this tile: masks padding rows of the (possibly partial) last tile.
    row0 = (c * spc + i) * tm
    rows = row0 + jax.lax.broadcasted_iota(jnp.int32, (tm, 1), 0)
    valid = (labels != -1) & (rows < n_rows)

    # log-softmax over the vocab (lane) axis.
    m = jnp.max(x, axis=-1, keepdims=True)
    lse = m + jnp.log(jnp.sum(jnp.exp(x - m), axis=-1, keepdims=True))   # (tm, 1)

    # Gather the label logit via a (1, V) lane iota broadcast against (tm, 1) labels.
    col = jax.lax.broadcasted_iota(jnp.int32, (1, v), 1)
    picked = jnp.sum(jnp.where(col == labels, x, 0.0), axis=-1, keepdims=True)  # (tm, 1)

    # Pure element-wise per-step accumulation (no per-step cross-lane reduce / scalar RMW).
    sum_acc[...] = sum_acc[...] + jnp.where(valid, lse - picked, 0.0)
    cnt_acc[...] = cnt_acc[...] + valid.astype(jnp.float32)

    # One reduce per core, on its last tile.
    @pl.when(i == spc - 1)
    def _():
        sum_out_ref[...] = jnp.full(sum_out_ref.shape, jnp.sum(sum_acc[...]), jnp.float32)
        cnt_out_ref[...] = jnp.full(cnt_out_ref.shape, jnp.sum(cnt_acc[...]), jnp.float32)


def pretraining_loss(
    mlm_logits,    # (N, V) float (native dtype; NOT upcast here), N = B*S
    mlm_targets,   # (N,)   int, -1 means ignore
    sop_logits,    # (B, 2) float
    sop_targets,   # (B,)   int in {0, 1}
    bce_logits,    # (B, K) float
    bce_targets,   # (B, K) float in [0, 1]
    targets_alpha=1.0,
    tm=None,       # row-tile size; auto-sized from VMEM capacity if None
    n_par=2,       # leading "parallel" grid axis (v7x megacore); auto-drops to 1 if it doesn't divide
):
    N, V = mlm_logits.shape
    itemsize = jnp.dtype(mlm_logits.dtype).itemsize

    # Trace-time hardware query for VMEM capacity (fallback: v7x-safe 64 MiB).
    try:
        vmem_cap = int(getattr(pltpu.get_tpu_info(), "vmem_capacity_bytes", 64 << 20))
    except Exception:  # pragma: no cover
        vmem_cap = 64 << 20

    if tm is None:
        # Budget: double-buffered native-dtype logits tile + ~4 f32 (tm, V) temporaries.
        per_row = V * (2 * itemsize + 4 * 4)
        tm = int(int(0.55 * vmem_cap) // max(per_row, 1))
        tm = max(8, min(512, tm))
    tm = int(tm)
    if tm >= N:
        tm = N                      # block == full array is always legal
    else:
        tm = max(8, (tm // 8) * 8)  # keep the sublane dim 8-aligned

    nb = pl.cdiv(N, tm)             # number of row tiles (last one may be partial; masked in-kernel)
    n_par = int(n_par)
    if n_par < 1 or nb % n_par != 0:
        n_par = 1
    spc = nb // n_par               # tiles handled by each core

    # Raise scoped VMEM to cover the pipelined tile + temporaries (leave physical headroom).
    vmem_need = (2 * tm * V * itemsize      # double-buffered logits tile (native dtype)
                 + 4 * tm * V * 4           # f32 intermediates headroom
                 + 4 * tm * 128 * 4         # (tm,1) targets buffers + scratch (lane-padded)
                 + (2 << 20))
    vmem_limit = int(min(max(vmem_need, 32 << 20), max(vmem_cap - (8 << 20), 16 << 20)))

    mlm_t2 = mlm_targets.reshape(N, 1).astype(jnp.int32)

    kernel = functools.partial(_mlm_ce_kernel, n_rows=N)

    sums, cnts = pl.pallas_call(
        kernel,
        out_shape=(jax.ShapeDtypeStruct((n_par, 1, 128), jnp.float32),
                   jax.ShapeDtypeStruct((n_par, 1, 128), jnp.float32)),
        grid_spec=pltpu.PrefetchScalarGridSpec(
            num_scalar_prefetch=0,
            grid=(n_par, spc),
            in_specs=[
                pl.BlockSpec((tm, V), lambda c, i: (c * spc + i, 0)),   # MLM logits tile
                pl.BlockSpec((tm, 1), lambda c, i: (c * spc + i, 0)),   # MLM target tile
            ],
            out_specs=[
                pl.BlockSpec((1, 1, 128), lambda c, i: (c, 0, 0)),      # per-core loss sum
                pl.BlockSpec((1, 1, 128), lambda c, i: (c, 0, 0)),      # per-core valid count
            ],
            scratch_shapes=[
                pltpu.VMEM((tm, 1), jnp.float32),   # per-row loss-sum accumulator
                pltpu.VMEM((tm, 1), jnp.float32),   # per-row valid-count accumulator
            ],
        ),
        compiler_params=pltpu.CompilerParams(
            dimension_semantics=("parallel", "arbitrary"),
            vmem_limit_bytes=vmem_limit,
        ),
    )(mlm_logits, mlm_t2)

    mlm_sum = jnp.sum(sums[:, 0, 0])
    mlm_cnt = jnp.sum(cnts[:, 0, 0])
    # NOTE: if every MLM target is -1 this is NaN — same as PyTorch CrossEntropyLoss.
    mlm_mean = mlm_sum / mlm_cnt

    # --- tiny epilogue in plain JAX (O(B*2) + O(B*K)): SOP cross-entropy + BCE-with-logits ---
    s = sop_logits.astype(jnp.float32)
    st = sop_targets.reshape(-1).astype(jnp.int32)
    slse = jax.nn.logsumexp(s, axis=-1)
    spicked = jnp.take_along_axis(s, st[:, None], axis=-1)[:, 0]
    sop_mean = jnp.mean(slse - spicked)

    z = bce_logits.astype(jnp.float32)
    t = bce_targets.astype(jnp.float32)
    bce_mean = jnp.mean(jnp.maximum(z, 0.0) - z * t + jnp.log1p(jnp.exp(-jnp.abs(z))))

    return mlm_mean + sop_mean + targets_alpha * bce_mean


def _reference_loss(mlm_logits, mlm_targets, sop_logits, sop_targets,
                    bce_logits, bce_targets, alpha=1.0):
    # Pure-JAX reference reproducing the PyTorch semantics.
    def ce(logits, targets, ignore_index=None):
        logits = logits.astype(jnp.float32)
        lse = jax.nn.logsumexp(logits, axis=-1)
        safe = jnp.where(targets < 0, 0, targets)
        picked = jnp.take_along_axis(logits, safe[:, None], axis=-1)[:, 0]
        per = lse - picked
        if ignore_index is not None:
            mask = targets != ignore_index
            return jnp.sum(jnp.where(mask, per, 0.0)) / jnp.sum(mask.astype(jnp.float32))
        return jnp.mean(per)

    mlm = ce(mlm_logits, mlm_targets, ignore_index=-1)
    sop = ce(sop_logits, sop_targets)
    z = bce_logits.astype(jnp.float32)
    t = bce_targets.astype(jnp.float32)
    bce = jnp.mean(jnp.maximum(z, 0.0) - z * t + jnp.log1p(jnp.exp(-jnp.abs(z))))
    return mlm + sop + alpha * bce


if __name__ == "__main__":
    key = jax.random.PRNGKey(0)
    k1, k2, k3, k4, k5, k6 = jax.random.split(key, 6)

    B, S, V, K = 2, 8, 128, 8
    N = B * S

    mlm_logits = jax.random.normal(k1, (N, V), dtype=jnp.float32)
    # targets in [-1, V): -1 means "ignore" (ignore_index=-1)
    mlm_targets = jax.random.randint(k2, (N,), -1, V, dtype=jnp.int32)
    sop_logits = jax.random.normal(k3, (B, 2), dtype=jnp.float32)
    sop_targets = jax.random.randint(k4, (B,), 0, 2, dtype=jnp.int32)
    bce_logits = jax.random.normal(k5, (B, K), dtype=jnp.float32)
    bce_targets = jax.random.uniform(k6, (B, K), dtype=jnp.float32)

    targets_alpha = 1.0

    loss = pretraining_loss(
        mlm_logits, mlm_targets, sop_logits, sop_targets,
        bce_logits, bce_targets, targets_alpha=targets_alpha,
    )
    loss = jax.block_until_ready(loss)

    ref = _reference_loss(
        mlm_logits, mlm_targets, sop_logits, sop_targets,
        bce_logits, bce_targets, alpha=targets_alpha,
    )
    assert np.allclose(np.asarray(loss), np.asarray(ref), rtol=1e-5, atol=1e-5), (loss, ref)

    print("KERNEL_OK")
</pallas_src>

<mosaic_0001>
module attributes {stable_mosaic.version = 11 : i64} {
  func.func @_mlm_ce_kernel(%arg0: i32, %arg1: i32, %arg2: memref<16x128xf32, #tpu.memory_space<vmem>>, %arg3: memref<16x1xi32, #tpu.memory_space<vmem>>, %arg4: memref<1x1x128xf32, #tpu.memory_space<vmem>>, %arg5: memref<1x1x128xf32, #tpu.memory_space<vmem>>, %arg6: memref<16x1xf32, #tpu.memory_space<vmem>>, %arg7: memref<16x1xf32, #tpu.memory_space<vmem>>) attributes {dimension_semantics = [#tpu.dimension_semantics<parallel>, #tpu.dimension_semantics<arbitrary>], iteration_bounds = array<i64: 1, 1>, scalar_prefetch = 0 : i64, scratch_operands = 2 : i64, tpu.core_type = #tpu.core_type<tc>, window_params = [{transform_indices = @transform_0, window_bounds = array<i64: 16, 128>}, {transform_indices = @transform_1, window_bounds = array<i64: 16, 1>}, {transform_indices = @transform_2, window_bounds = array<i64: 1, 1, 128>}, {transform_indices = @transform_3, window_bounds = array<i64: 1, 1, 128>}]} {
    %c0_i32 = arith.constant 0 : i32
    %0 = arith.cmpi eq, %arg1, %c0_i32 : i32
    %1 = arith.extui %0 : i1 to i32
    %c0_i32_0 = arith.constant 0 : i32
    %2 = arith.cmpi ne, %1, %c0_i32_0 : i32
    scf.if %2 {
      %cst_19 = arith.constant 0.000000e+00 : f32
      %47 = vector.broadcast %cst_19 : f32 to vector<16x1xf32>
      %c0_20 = arith.constant 0 : index
      %c0_21 = arith.constant 0 : index
      %48 = vector.load %arg6[%c0_20, %c0_21] : memref<16x1xf32, #tpu.memory_space<vmem>>, vector<16x1xf32>
      tpu.vector_store %arg6[%c0_20, %c0_21], %47 {strides = array<i32>} : memref<16x1xf32, #tpu.memory_space<vmem>>, vector<16x1xf32>,
      %cst_22 = arith.constant 0.000000e+00 : f32
      %49 = vector.broadcast %cst_22 : f32 to vector<16x1xf32>
      %c0_23 = arith.constant 0 : index
      %c0_24 = arith.constant 0 : index
      %50 = vector.load %arg7[%c0_23, %c0_24] : memref<16x1xf32, #tpu.memory_space<vmem>>, vector<16x1xf32>
      tpu.vector_store %arg7[%c0_23, %c0_24], %49 {strides = array<i32>} : memref<16x1xf32, #tpu.memory_space<vmem>>, vector<16x1xf32>,
    } else {
    }
    %c0 = arith.constant 0 : index
    %c0_1 = arith.constant 0 : index
    %3 = vector.load %arg2[%c0, %c0_1] : memref<16x128xf32, #tpu.memory_space<vmem>>, vector<16x128xf32>
    %c0_2 = arith.constant 0 : index
    %c0_3 = arith.constant 0 : index
    %4 = vector.load %arg3[%c0_2, %c0_3] : memref<16x1xi32, #tpu.memory_space<vmem>>, vector<16x1xi32>
    %c1_i32 = arith.constant 1 : i32
    %5 = arith.muli %arg0, %c1_i32 : i32
    %6 = arith.addi %5, %arg1 : i32
    %c16_i32 = arith.constant 16 : i32
    %7 = arith.muli %6, %c16_i32 : i32
    %8 = tpu.iota {dimensions = array<i32: 0>} : vector<16x1xi32>
    %9 = vector.broadcast %7 : i32 to vector<16x1xi32>
    %10 = arith.addi %9, %8 : vector<16x1xi32>
    %c-1_i32 = arith.constant -1 : i32
    %11 = vector.broadcast %c-1_i32 : i32 to vector<16x1xi32>
    %12 = arith.cmpi ne, %4, %11 : vector<16x1xi32>
    %c16_i32_4 = arith.constant 16 : i32
    %13 = vector.broadcast %c16_i32_4 : i32 to vector<16x1xi32>
    %14 = arith.cmpi slt, %10, %13 : vector<16x1xi32>
    %15 = arith.andi %12, %14 : vector<16x1xi1>
    %cst = arith.constant dense<0xFF800000> : vector<16xf32>
    %16 = vector.multi_reduction <maximumf>, %3, %cst [1] : vector<16x128xf32> to vector<16xf32>
    %17 = vector.shape_cast %16 : vector<16xf32> to vector<16x1xf32>
    %18 = vector.broadcast %17 : vector<16x1xf32> to vector<16x128xf32>
    %19 = arith.subf %3, %18 : vector<16x128xf32>
    %20 = math.exp %19 : vector<16x128xf32>
    %cst_5 = arith.constant dense<0.000000e+00> : vector<16xf32>
    %21 = vector.multi_reduction <add>, %20, %cst_5 [1] : vector<16x128xf32> to vector<16xf32>
    %22 = vector.shape_cast %21 : vector<16xf32> to vector<16x1xf32>
    %23 = math.log %22 : vector<16x1xf32>
    %24 = arith.addf %17, %23 : vector<16x1xf32>
    %25 = tpu.iota {dimensions = array<i32: 1>} : vector<1x128xi32>
    %26 = vector.broadcast %25 : vector<1x128xi32> to vector<16x128xi32>
    %27 = vector.broadcast %4 : vector<16x1xi32> to vector<16x128xi32>
    %28 = arith.cmpi eq, %26, %27 : vector<16x128xi32>
    %cst_6 = arith.constant 0.000000e+00 : f32
    %29 = vector.broadcast %cst_6 : f32 to vector<16x128xf32>
    %30 = arith.select %28, %3, %29 : vector<16x128xi1>, vector<16x128xf32>
    %cst_7 = arith.constant dense<0.000000e+00> : vector<16xf32>
    %31 = vector.multi_reduction <add>, %30, %cst_7 [1] : vector<16x128xf32> to vector<16xf32>
    %32 = vector.shape_cast %31 : vector<16xf32> to vector<16x1xf32>
    %c0_8 = arith.constant 0 : index
    %c0_9 = arith.constant 0 : index
    %33 = vector.load %arg6[%c0_8, %c0_9] : memref<16x1xf32, #tpu.memory_space<vmem>>, vector<16x1xf32>
    %34 = arith.subf %24, %32 : vector<16x1xf32>
    %cst_10 = arith.constant 0.000000e+00 : f32
    %35 = vector.broadcast %cst_10 : f32 to vector<16x1xf32>
    %36 = arith.select %15, %34, %35 : vector<16x1xi1>, vector<16x1xf32>
    %37 = arith.addf %33, %36 : vector<16x1xf32>
    %c0_11 = arith.constant 0 : index
    %c0_12 = arith.constant 0 : index
    %38 = vector.load %arg6[%c0_11, %c0_12] : memref<16x1xf32, #tpu.memory_space<vmem>>, vector<16x1xf32>
    tpu.vector_store %arg6[%c0_11, %c0_12], %37 {strides = array<i32>} : memref<16x1xf32, #tpu.memory_space<vmem>>, vector<16x1xf32>,
    %c0_13 = arith.constant 0 : index
    %c0_14 = arith.constant 0 : index
    %39 = vector.load %arg7[%c0_13, %c0_14] : memref<16x1xf32, #tpu.memory_space<vmem>>, vector<16x1xf32>
    %40 = arith.extui %15 : vector<16x1xi1> to vector<16x1xi32>
    %41 = arith.sitofp %40 : vector<16x1xi32> to vector<16x1xf32>
    %42 = arith.addf %39, %41 : vector<16x1xf32>
    %c0_15 = arith.constant 0 : index
    %c0_16 = arith.constant 0 : index
    %43 = vector.load %arg7[%c0_15, %c0_16] : memref<16x1xf32, #tpu.memory_space<vmem>>, vector<16x1xf32>
    tpu.vector_store %arg7[%c0_15, %c0_16], %42 {strides = array<i32>} : memref<16x1xf32, #tpu.memory_space<vmem>>, vector<16x1xf32>,
    %c0_i32_17 = arith.constant 0 : i32
    %44 = arith.cmpi eq, %arg1, %c0_i32_17 : i32
    %45 = arith.extui %44 : i1 to i32
    %c0_i32_18 = arith.constant 0 : i32
    %46 = arith.cmpi ne, %45, %c0_i32_18 : i32
    scf.if %46 {
      %c0_19 = arith.constant 0 : index
      %c0_20 = arith.constant 0 : index
      %47 = vector.load %arg6[%c0_19, %c0_20] : memref<16x1xf32, #tpu.memory_space<vmem>>, vector<16x1xf32>
      %48 = vector.shape_cast %47 : vector<16x1xf32> to vector<1x16x1xf32>
      %cst_21 = arith.constant dense<0.000000e+00> : vector<1xf32>
      %49 = vector.multi_reduction <add>, %48, %cst_21 [1, 2] : vector<1x16x1xf32> to vector<1xf32>
      %50 = vector.shape_cast %49 : vector<1xf32> to vector<1x1x1xf32>
      %51 = vector.extract %50[0, 0, 0] : f32 from vector<1x1x1xf32>
      %52 = vector.broadcast %51 : f32 to vector<1x1x128xf32>
      %c0_22 = arith.constant 0 : index
      %c0_23 = arith.constant 0 : index
      %c0_24 = arith.constant 0 : index
      %53 = vector.load %arg4[%c0_22, %c0_23, %c0_24] : memref<1x1x128xf32, #tpu.memory_space<vmem>>, vector<1x1x128xf32>
      tpu.vector_store %arg4[%c0_22, %c0_23, %c0_24], %52 {strides = array<i32>} : memref<1x1x128xf32, #tpu.memory_space<vmem>>, vector<1x1x128xf32>,
      %c0_25 = arith.constant 0 : index
      %c0_26 = arith.constant 0 : index
      %54 = vector.load %arg7[%c0_25, %c0_26] : memref<16x1xf32, #tpu.memory_space<vmem>>, vector<16x1xf32>
      %55 = vector.shape_cast %54 : vector<16x1xf32> to vector<1x16x1xf32>
      %cst_27 = arith.constant dense<0.000000e+00> : vector<1xf32>
      %56 = vector.multi_reduction <add>, %55, %cst_27 [1, 2] : vector<1x16x1xf32> to vector<1xf32>
      %57 = vector.shape_cast %56 : vector<1xf32> to vector<1x1x1xf32>
      %58 = vector.extract %57[0, 0, 0] : f32 from vector<1x1x1xf32>
      %59 = vector.broadcast %58 : f32 to vector<1x1x128xf32>
      %c0_28 = arith.constant 0 : index
      %c0_29 = arith.constant 0 : index
      %c0_30 = arith.constant 0 : index
      %60 = vector.load %arg5[%c0_28, %c0_29, %c0_30] : memref<1x1x128xf32, #tpu.memory_space<vmem>>, vector<1x1x128xf32>
      tpu.vector_store %arg5[%c0_28, %c0_29, %c0_30], %59 {strides = array<i32>} : memref<1x1x128xf32, #tpu.memory_space<vmem>>, vector<1x1x128xf32>,
    } else {
    }
    return
  }
  func.func @transform_0(%arg0: i32, %arg1: i32) -> (i32, i32) {
    %c1_i32 = arith.constant 1 : i32
    %0 = arith.muli %arg0, %c1_i32 : i32
    %1 = arith.addi %0, %arg1 : i32
    %c0_i32 = arith.constant 0 : i32
    %c0_i32_0 = arith.constant 0 : i32
    return %1, %c0_i32 : i32, i32
  }
  func.func @transform_1(%arg0: i32, %arg1: i32) -> (i32, i32) {
    %c1_i32 = arith.constant 1 : i32
    %0 = arith.muli %arg0, %c1_i32 : i32
    %1 = arith.addi %0, %arg1 : i32
    %c0_i32 = arith.constant 0 : i32
    %c0_i32_0 = arith.constant 0 : i32
    return %1, %c0_i32 : i32, i32
  }
  func.func @transform_2(%arg0: i32, %arg1: i32) -> (i32, i32, i32) {
    %c0_i32 = arith.constant 0 : i32
    %c0_i32_0 = arith.constant 0 : i32
    %c0_i32_1 = arith.constant 0 : i32
    return %arg0, %c0_i32, %c0_i32_0 : i32, i32, i32
  }
  func.func @transform_3(%arg0: i32, %arg1: i32) -> (i32, i32, i32) {
    %c0_i32 = arith.constant 0 : i32
    %c0_i32_0 = arith.constant 0 : i32
    %c0_i32_1 = arith.constant 0 : i32
    return %arg0, %c0_i32, %c0_i32_0 : i32, i32, i32
  }
}

</mosaic_0001>

<llo_original>
// kernel: tpu_custom_call.1
$region0: #{tpu_custom_call.1}
  #allocation0 [shape = 'u32[]', space=smem, size = 0x4, offset = 0x4, fixed_abs, tag = 'smem constant byte address 0x4 - core index']
  #allocation1 [shape = 'u32[144,128]{1,0:T(1,128)}', space=vmem, size = 0x12000, scoped, tag = 'internal scratch']
  #allocation2 [shape = 'f32[16,1]{1,0:T(8,128)}', space=vmem, size = 0x2000, scoped, tag = 'scratch operand']
  #allocation3 [shape = 'f32[16,1]{1,0:T(8,128)}', space=vmem, size = 0x2000, scoped, tag = 'scratch operand']
  %s0 = inlined_call_operand.vmem [shape: f32[16,128], index: 0, kind: input, shape index: {}]
  %s1 = inlined_call_operand.vmem [shape: s32[16,1], index: 1, kind: input, shape index: {}]
  %s2 = inlined_call_operand.hbm [shape: f32[1,1,128], index: 2, kind: output, shape index: {0}]
  %s3 = inlined_call_operand.hbm [shape: f32[1,1,128], index: 3, kind: output, shape index: {1}]
  %4 = xla_tuple %s2, %s3
  %s5 = sld [smem:[#allocation0]]
  $region34: #{tpu_custom_call.1} parent=0
    _
  %s7 = ssub.s32 1, %s5
  %s8 = scalar_select 0, %s7, %s5
  $region1: #{tpu_custom_call.1} parent=0
    #allocation4 [shape = 'u8[512]{0}', space=vmem, size = 0x400, scoped, tag = 'output window, operand 0, single buffered']
    #allocation5 [shape = 's32[1]{0}', space=sflag, size = 0x4, scoped, tag = 'scoped memory for tpu_custom_call.1']
    #allocation6 [shape = 'u8[512]{0}', space=vmem, size = 0x400, scoped, tag = 'output window, operand 1, single buffered']
    #allocation7 [shape = 's32[1]{0}', space=sflag, size = 0x4, scoped, tag = 'scoped memory for tpu_custom_call.1']
    %9 = vsyncpa [#allocation5], 0
    %10 = vsyncpa [#allocation7], 0
    // Predicated region
    $region2: #{tpu_custom_call.1} parent=1 // pred_check
      _
    $region3: #{tpu_custom_call.1} parent=1 // pred_check_branch
      %12 = sbr.rel (0) target = $region5
    $region4: #{tpu_custom_call.1} parent=1 // pred_region
      %s13 = sadd.s32 0, 0
      %s14 = smul.u32 2, %s13
      %p15 = scmp.lt.s32.totalorder %s14, 1
      %s16 = scalar_select %p15, %s14, 1
      %s17 = smul.addr %s16, 8
      %s18 = scalar_lea.vmem %s0, %s17
      %s19 = sadd.s32 0, 0
      %s20 = smul.u32 2, %s19
    $region5: #{tpu_custom_call.1} parent=1 // pred_fallthru
      _
    // Predicated region
    $region6: #{tpu_custom_call.1} parent=1 // pred_check
      _
    $region7: #{tpu_custom_call.1} parent=1 // pred_check_branch
      %22 = sbr.rel (0) target = $region9
    $region8: #{tpu_custom_call.1} parent=1 // pred_region
      %s23 = sadd.s32 0, 0
      %s24 = smul.u32 2, %s23
      %p25 = scmp.lt.s32.totalorder %s24, 1
      %s26 = scalar_select %p25, %s24, 1
      %s27 = smul.addr %s26, 8
      %s28 = scalar_lea.vmem %s1, %s27
      %s29 = sadd.s32 0, 0
      %s30 = smul.u32 2, %s29
    $region9: #{tpu_custom_call.1} parent=1 // pred_fallthru
      _
    %s31 = sadd.s32 0, 0
    %s32 = smul.u32 2, %s31
    %p33 = scmp.lt.s32.totalorder %s32, 1
    %s34 = scalar_select %p33, %s32, 1
    %s35 = smul.addr %s34, 8
    %s36 = scalar_lea.vmem %s0, %s35
    %s37 = sadd.s32 0, 0
    %s38 = smul.u32 2, %s37
    %p39 = scmp.lt.s32.totalorder %s38, 1
    %s40 = scalar_select %p39, %s38, 1
    %s41 = smul.addr %s40, 8
    %s42 = scalar_lea.vmem %s1, %s41
    %s43 = sadd.s32 0, 0
    %s44 = smul.u32 2, %s43
    %p45 = scmp.lt.s32.totalorder %s44, 1
    %s46 = scalar_select %p45, %s44, 1
    %s47 = smul.addr %s46, 8
    %s48 = scalar_lea.vmem %s0, %s47
    %s49 = sadd.s32 0, 0
    %s50 = smul.u32 2, %s49
    %s51 = sadd.s32 0, 0
    %s52 = smul.u32 2, %s51
    %p53 = scmp.lt.s32.totalorder %s52, 1
    %s54 = scalar_select %p53, %s52, 1
    %s55 = smul.addr %s54, 8
    %s56 = scalar_lea.vmem %s1, %s55
    %s57 = sadd.s32 0, 0
    %s58 = smul.u32 2, %s57
    %p59 = scmp.eq.s32.totalorder 0, 0
    // Predicated region
    $region10: #{tpu_custom_call.1} parent=1 // pred_check
      %p60 = pneg %p59
    $region11: #{tpu_custom_call.1} parent=1 // pred_check_branch
      %62 = sbr.rel (%p60) target = $region13
    $region12: #{tpu_custom_call.1} parent=1 // pred_region
      %vm63 = vcmask 7168
      %64 = vst.msk [vmem:[#allocation2] sm:$0xff] %vm63, 0.0
      %65 = vst.msk [vmem:[#allocation2 + $0x8] sm:$0xff] %vm63, 0.0
      %66 = vst.msk [vmem:[#allocation3] sm:$0xff] %vm63, 0.0
      %67 = vst.msk [vmem:[#allocation3 + $0x8] sm:$0xff] %vm63, 0.0
    $region13: #{tpu_custom_call.1} parent=1 // pred_fallthru
      _
    %v68 = vld [vmem:[%s48] sm:$0xff]
    %v69 = vld [vmem:[%s48 + $0x8] sm:$0xff]
    %v70 = vld [vmem:[%s56] sm:$0xff]
    %v71 = vld [vmem:[%s56 + $0x8] sm:$0xff]
    %s72 = sadd.s32 0, 0
    %s73 = smul.u32 %s72, 16
    %v74 = vlaneseq
    %v75 = vshrl.u32 %v74, 7
    %v76 = vadd.s32 %v75, 8
    %v77 = vstv %s73
    %v78 = vadd.s32 %v77, %v75
    %v79 = vadd.s32 %v77, %v76
    %vm80 = vcmp.ne.s32.totalorder %v70, 4294967295
    %vm81 = vcmp.ne.s32.totalorder %v71, 4294967295
    %vm82 = vcmp.lt.s32.totalorder %v78, 16
    %vm83 = vcmp.lt.s32.totalorder %v79, 16
    %vm84 = vmand %vm80, %vm82
    %vm85 = vmand %vm81, %vm83
    %86 = vmax.xlane.f32.xlu0 %v68
    %v87 = vpop.xlane.xlu0 %86
    %88 = vmax.xlane.f32.xlu0 %v69
    %v89 = vpop.xlane.xlu0 %88
    %v90 = vsub.f32 %v68, %v87
    %v91 = vsub.f32 %v69, %v89
    %v92 = vmul.f32 %v90, 1.442695
    %v93 = vpow.pop %v92
    %v94 = vmul.f32 %v91, 1.442695
    %v95 = vpow.pop %v94
    %96 = vadd.xlane.f32.xlu0 %v93
    %v97 = vpop.xlane.xlu0 %96
    %98 = vadd.xlane.f32.xlu0 %v95
    %v99 = vpop.xlane.xlu0 %98
    %v100 = vlog2.pop %v97
    %v101 = vmul.f32 %v100, 0.6931472
    %v102 = vlog2.pop %v99
    %v103 = vmul.f32 %v102, 0.6931472
    %v104 = vadd.f32 %v87, %v101
    %v105 = vadd.f32 %v89, %v103
    %v106 = vlaneseq
    %v107 = vand.u32 %v106, 127
    %108 = vset.pattern.permute.xlu0 0
    %109 = vperm.xlu0 %108, %v70
    %v110 = vpop.permute.xlu0 %109
    %111 = vset.pattern.permute.xlu0 0
    %112 = vperm.xlu0 %111, %v71
    %v113 = vpop.permute.xlu0 %112
    %vm114 = vcmp.eq.s32.totalorder %v107, %v110
    %vm115 = vcmp.eq.s32.totalorder %v107, %v113
    %v116 = vsel %vm114, %v68, 0.0
    %v117 = vsel %vm115, %v69, 0.0
    %118 = vadd.xlane.f32.xlu0 %v116
    %v119 = vpop.xlane.xlu0 %118
    %120 = vadd.xlane.f32.xlu0 %v117
    %v121 = vpop.xlane.xlu0 %120
    %v122 = vld [vmem:[#allocation2] sm:$0xff]
    %v123 = vld [vmem:[#allocation2 + $0x8] sm:$0xff]
    %v124 = vsub.f32 %v104, %v119
    %v125 = vsub.f32 %v105, %v121
    %v126 = vsel %vm84, %v124, 0.0
    %v127 = vsel %vm85, %v125, 0.0
    %v128 = vadd.f32 %v122, %v126
    %v129 = vadd.f32 %v123, %v127
    %vm130 = vcmask 7168
    %131 = vst.msk [vmem:[#allocation2] sm:$0xff] %vm130, %v128
    %132 = vst.msk [vmem:[#allocation2 + $0x8] sm:$0xff] %vm130, %v129
    %v133 = vld [vmem:[#allocation3] sm:$0xff]
    %v134 = vld [vmem:[#allocation3 + $0x8] sm:$0xff]
    %v135 = vsel %vm84, 1, 0
    %v136 = vsel %vm85, 1, 0
    %v137 = vcvt.s32.f32 %v135
    %v138 = vcvt.s32.f32 %v136
    %v139 = vadd.f32 %v133, %v137
    %v140 = vadd.f32 %v134, %v138
    %141 = vst.msk [vmem:[#allocation3] sm:$0xff] %vm130, %v139
    %142 = vst.msk [vmem:[#allocation3 + $0x8] sm:$0xff] %vm130, %v140
    // Predicated region
    $region14: #{tpu_custom_call.1} parent=1 // pred_check
      %p143 = pneg %p59
    $region15: #{tpu_custom_call.1} parent=1 // pred_check_branch
      %145 = sbr.rel (%p143) target = $region17
    $region16: #{tpu_custom_call.1} parent=1 // pred_region
      %v146 = vld [vmem:[#allocation2] sm:$0xff]
      %v147 = vld [vmem:[#allocation2 + $0x8] sm:$0xff]
      %v148 = vsel %vm130, %v146, 0.0
      %v149 = vsel %vm130, %v147, 0.0
      %v150 = vadd.f32 %v148, %v149
      %151 = vadd.xlane.f32.xlu0 %v150
      %v152 = vpop.xlane.xlu0 %151
      %v153 = vrot.slane %v152, 4
      %v154 = vadd.f32 %v152, %v153
      %v155 = vrot.slane %v154, 2
      %v156 = vadd.f32 %v154, %v155
      %v157 = vrot.slane %v156, 1
      %v158 = vadd.f32 %v156, %v157
      %s159 = vtos %v158
      %v160 = vstv %s159
      %161 = vst [vmem:[#allocation4] sm:$0x1] %v160
      %v162 = vld [vmem:[#allocation3] sm:$0xff]
      %v163 = vld [vmem:[#allocation3 + $0x8] sm:$0xff]
      %v164 = vsel %vm130, %v162, 0.0
      %v165 = vsel %vm130, %v163, 0.0
      %v166 = vadd.f32 %v164, %v165
      %167 = vadd.xlane.f32.xlu0 %v166
      %v168 = vpop.xlane.xlu0 %167
      %v169 = vrot.slane %v168, 4
      %v170 = vadd.f32 %v168, %v169
      %v171 = vrot.slane %v170, 2
      %v172 = vadd.f32 %v170, %v171
      %v173 = vrot.slane %v172, 1
      %v174 = vadd.f32 %v172, %v173
      %s175 = vtos %v174
      %v176 = vstv %s175
      %177 = vst [vmem:[#allocation6] sm:$0x1] %v176
    $region17: #{tpu_custom_call.1} parent=1 // pred_fallthru
      _
    // Predicated region
    $region18: #{tpu_custom_call.1} parent=1 // pred_check
      _
    $region19: #{tpu_custom_call.1} parent=1 // pred_check_branch
      %179 = sbr.rel (0) target = $region21
    $region20: #{tpu_custom_call.1} parent=1 // pred_region
      %s181 = ssub.s32 16, 16
      %182 = vsyncadd [#allocation5], %s181
      %s184 = sshll.u32 [#allocation4], 4
      %s185 = int_to_ptr.vmem [resolvable:$true] %s184
      %187 = dma.vmem_to_hbm [thread:$0]  %s185, 16, %s2, [#allocation5]
    $region21: #{tpu_custom_call.1} parent=1 // pred_fallthru
      _
    // Predicated region
    $region22: #{tpu_custom_call.1} parent=1 // pred_check
      _
    $region23: #{tpu_custom_call.1} parent=1 // pred_check_branch
      %189 = sbr.rel (0) target = $region25
    $region24: #{tpu_custom_call.1} parent=1 // pred_region
      %s191 = ssub.s32 16, 16
      %192 = vsyncadd [#allocation7], %s191
      %s194 = sshll.u32 [#allocation6], 4
      %s195 = int_to_ptr.vmem [resolvable:$true] %s194
      %197 = dma.vmem_to_hbm [thread:$0]  %s195, 16, %s3, [#allocation7]
    $region25: #{tpu_custom_call.1} parent=1 // pred_fallthru
      _
    // Predicated region
    $region26: #{tpu_custom_call.1} parent=1 // pred_check
      _
    $region27: #{tpu_custom_call.1} parent=1 // pred_check_branch
      %199 = sbr.rel (0) target = $region29
    $region28: #{tpu_custom_call.1} parent=1 // pred_region
      %200 = dma.done [#allocation5], 16
    $region29: #{tpu_custom_call.1} parent=1 // pred_fallthru
      _
    // Predicated region
    $region30: #{tpu_custom_call.1} parent=1 // pred_check
      _
    $region31: #{tpu_custom_call.1} parent=1 // pred_check_branch
      %202 = sbr.rel (0) target = $region33
    $region32: #{tpu_custom_call.1} parent=1 // pred_region
      %203 = dma.done [#allocation7], 16
    $region33: #{tpu_custom_call.1} parent=1 // pred_fallthru
      _
    %204 = vsyncpa [#allocation5], 1
    %205 = vsyncpa [#allocation7], 1

</llo_original>
